<compile_context>
chip_gen: v6e
topology: v6e:2x2x1
jax: 0.10.0
libtpu: 0.0.40
codegen_flags: <defaults>
</compile_context>

<pallas_src>
import jax
import jax.numpy as jnp
from jax.experimental import pallas as pl
from jax.experimental.pallas import tpu as pltpu

_LANE = 128                                # full vreg lane width
_TARGET_TILE_BYTES = 2 * 1024 * 1024       # per-buffer tile (~2 MiB); x4 when pipelined
_SMALL_TENSOR_BYTES = 1 << 20              # below this, native XLA copy beats kernel launch
_SINGLE_BLOCK_MAX_BYTES = 2 * 1024 * 1024  # unaligned-shape single-block fallback cap


def _identity_copy_kernel(x_ref, o_ref):
    # Pure pass-through of one lane-dense VMEM tile.
    o_ref[...] = x_ref[...]


def _max_tile_rows(itemsize: int) -> int:
    rows = _TARGET_TILE_BYTES // (_LANE * itemsize)
    return max(8, (rows // 8) * 8)


def _lane_dense_copy(x2: jax.Array, tile_rows: int) -> jax.Array:
    """Tiled copy of a (rows, 128) lane-dense slab. Ragged last block is masked."""
    rows = x2.shape[0]
    grid = (pl.cdiv(rows, tile_rows),)
    # TODO(synk): on v7x, verify in the trace that "parallel" actually shards the
    # grid axis across both TensorCores; otherwise pre-split the leading axis by core.
    return pl.pallas_call(
        _identity_copy_kernel,
        out_shape=jax.ShapeDtypeStruct(x2.shape, x2.dtype),
        grid=grid,
        in_specs=[pl.BlockSpec((tile_rows, _LANE), lambda i: (i, 0))],
        out_specs=pl.BlockSpec((tile_rows, _LANE), lambda i: (i, 0)),
        compiler_params=pltpu.CompilerParams(
            dimension_semantics=("parallel",)),
    )(x2)


def _full_block_copy(x: jax.Array) -> jax.Array:
    """Whole-array single-block copy (for small, non-lane-aligned shapes)."""
    return pl.pallas_call(
        _identity_copy_kernel,
        out_shape=jax.ShapeDtypeStruct(x.shape, x.dtype),
    )(x)


@jax.jit
def _pallas_identity_copy(x: jax.Array) -> jax.Array:
    """Materialized identity copy via a lane-dense, tiled Pallas kernel."""
    orig_shape = x.shape
    total = x.size
    itemsize = jnp.dtype(x.dtype).itemsize
    max_rows = _max_tile_rows(itemsize)

    if total % _LANE == 0:
        # Common case (conv feature maps): free bitcast-reshape to (rows, 128),
        # no padding, no output slice, single HBM read + single HBM write.
        rows = total // _LANE
        tile_rows = rows if rows <= max_rows else max_rows
        y2 = _lane_dense_copy(x.reshape(rows, _LANE), tile_rows)
        return y2.reshape(orig_shape)

    # Not lane-aligned.
    if total * itemsize <= _SINGLE_BLOCK_MAX_BYTES:
        # Small: copy the whole array as one full-extent block (no padding ops).
        return _full_block_copy(x)

    # Large & unaligned (rare): pad once to lane width. This costs one extra
    # HBM pass for the pad + slice; acceptable for this uncommon shape class.
    flat = x.reshape(-1)
    lane_pad = (-total) % _LANE
    flat = jnp.pad(flat, (0, lane_pad))
    rows = flat.size // _LANE
    tile_rows = rows if rows <= max_rows else max_rows
    y2 = _lane_dense_copy(flat.reshape(rows, _LANE), tile_rows)
    return y2.reshape(-1)[:total].reshape(orig_shape)


_xla_copy = jax.jit(lambda t: jnp.copy(t))


def print_layer(name: str, x: jax.Array, *, materialize: bool = False,
                force_pallas: bool = False) -> jax.Array:
    """Pallas equivalent of PrintLayer.forward.

    Default (materialize=False): host-side print + pass-through -- no kernel,
    no HBM traffic.
    materialize=True: return a fresh buffer. Tiny tensors use a native XLA
    copy (launch overhead dominates); larger tensors (or force_pallas=True)
    use the tiled lane-dense Pallas copy kernel.
    """
    # Host-side print of the static shape. Under jit this fires at trace time
    # (once per shape), not per forward call -- documented divergence from
    # PyTorch eager per-call print semantics.
    print(name, tuple(x.shape))
    if not materialize:
        return x
    if not force_pallas and x.nbytes < _SMALL_TENSOR_BYTES:
        return _xla_copy(x)
    return _pallas_identity_copy(x)


if __name__ == "__main__":
    key = jax.random.PRNGKey(0)
    # NCHW input, small shapes consistent with a conv-net feature map.
    x = jax.random.normal(key, (2, 4, 16, 16), dtype=jnp.float32)

    # Fast path (the real optimization): no kernel, pure pass-through.
    y_fast = jax.block_until_ready(print_layer("print_layer", x))
    assert y_fast.shape == x.shape and y_fast.dtype == x.dtype
    assert bool(jnp.all(y_fast == x))

    # Materialized path: exercise the lane-dense tiled Pallas copy kernel.
    y_copy = jax.block_until_ready(
        print_layer("print_layer", x, materialize=True, force_pallas=True))
    assert y_copy.shape == x.shape and y_copy.dtype == x.dtype
    assert bool(jnp.all(y_copy == x))

    # Non-lane-aligned shape exercises the full-extent single-block fallback.
    x_odd = jax.random.normal(key, (2, 4, 15, 15), dtype=jnp.float32)
    y_odd = jax.block_until_ready(
        print_layer("print_layer_odd", x_odd, materialize=True, force_pallas=True))
    assert y_odd.shape == x_odd.shape and y_odd.dtype == x_odd.dtype
    assert bool(jnp.all(y_odd == x_odd))

    print("KERNEL_OK")
</pallas_src>

<mosaic_0001>
module attributes {stable_mosaic.version = 11 : i64} {
  func.func @_identity_copy_kernel(%arg0: i32, %arg1: memref<16x128xf32, #tpu.memory_space<vmem>>, %arg2: memref<16x128xf32, #tpu.memory_space<vmem>>) attributes {dimension_semantics = [#tpu.dimension_semantics<parallel>], iteration_bounds = array<i64: 1>, scalar_prefetch = 0 : i64, scratch_operands = 0 : i64, tpu.core_type = #tpu.core_type<tc>, window_params = [{transform_indices = @transform_0, window_bounds = array<i64: 16, 128>}, {transform_indices = @transform_1, window_bounds = array<i64: 16, 128>}]} {
    %c0 = arith.constant 0 : index
    %c0_0 = arith.constant 0 : index
    %0 = vector.load %arg1[%c0, %c0_0] : memref<16x128xf32, #tpu.memory_space<vmem>>, vector<16x128xf32>
    %c0_1 = arith.constant 0 : index
    %c0_2 = arith.constant 0 : index
    %1 = vector.load %arg2[%c0_1, %c0_2] : memref<16x128xf32, #tpu.memory_space<vmem>>, vector<16x128xf32>
    tpu.vector_store %arg2[%c0_1, %c0_2], %0 {strides = array<i32>} : memref<16x128xf32, #tpu.memory_space<vmem>>, vector<16x128xf32>,
    return
  }
  func.func @transform_0(%arg0: i32) -> (i32, i32) {
    %c0_i32 = arith.constant 0 : i32
    %c0_i32_0 = arith.constant 0 : i32
    return %arg0, %c0_i32 : i32, i32
  }
  func.func @transform_1(%arg0: i32) -> (i32, i32) {
    %c0_i32 = arith.constant 0 : i32
    %c0_i32_0 = arith.constant 0 : i32
    return %arg0, %c0_i32 : i32, i32
  }
}

</mosaic_0001>

<llo_original>
// kernel: _pallas_identity_copy.1
$region0: #{_pallas_identity_copy.1}
  #allocation0 [shape = 'u32[]', space=smem, size = 0x4, offset = 0x4, fixed_abs, tag = 'smem constant byte address 0x4 - core index']
  #allocation1 [shape = 'u32[144,128]{1,0:T(1,128)}', space=vmem, size = 0x12000, scoped, tag = 'internal scratch']
  %s0 = inlined_call_operand.vmem [shape: f32[16,128], index: 0, kind: input, shape index: {}]
  %s1 = inlined_call_operand.vmem [shape: f32[16,128], index: 1, kind: output, shape index: {}]
  %s2 = sld [smem:[#allocation0]]
  $region14: #{_pallas_identity_copy.1} parent=0
    _
  %s4 = ssub.s32 1, %s2
  %s5 = scalar_select 0, %s4, %s2
  // Predicated region
  $region2: #{_pallas_identity_copy.1} parent=0 // pred_check
    _
  $region3: #{_pallas_identity_copy.1} parent=0 // pred_check_branch
    %7 = sbr.rel (0) target = $region5
  $region4: #{_pallas_identity_copy.1} parent=0 // pred_region
    _
  $region5: #{_pallas_identity_copy.1} parent=0 // pred_fallthru
    _
  %v8 = vld [vmem:[%s0] sm:$0xff]
  %v9 = vld [vmem:[%s0 + $0x8] sm:$0xff]
  %10 = vst [vmem:[%s1] sm:$0xff] %v8
  %11 = vst [vmem:[%s1 + $0x8] sm:$0xff] %v9
  // Predicated region
  $region6: #{_pallas_identity_copy.1} parent=0 // pred_check
    _
  $region7: #{_pallas_identity_copy.1} parent=0 // pred_check_branch
    %13 = sbr.rel (0) target = $region9
  $region8: #{_pallas_identity_copy.1} parent=0 // pred_region
    _
  $region9: #{_pallas_identity_copy.1} parent=0 // pred_fallthru
    _
  // Predicated region
  $region10: #{_pallas_identity_copy.1} parent=0 // pred_check
    _
  $region11: #{_pallas_identity_copy.1} parent=0 // pred_check_branch
    %15 = sbr.rel (0) target = $region13
  $region12: #{_pallas_identity_copy.1} parent=0 // pred_region
    _
  $region13: #{_pallas_identity_copy.1} parent=0 // pred_fallthru
    _

</llo_original>
